<compile_context>
chip_gen: v7x
topology: tpu7x:2x2x1
jax: 0.10.0
libtpu: 0.0.40
codegen_flags: <defaults>
</compile_context>

<pallas_src>
import numpy as np

import jax
import jax.numpy as jnp
from jax import lax
from jax.experimental import pallas as pl
from jax.experimental.pallas import tpu as pltpu

# ---------------- problem sizes (small, consistent with the module) ----------------
B = 8          # batch (S == T == B)
OBS_DIM = 16
ACTION_DIM = 4  # unused by forward
Z_DIM = 16
HIDDEN = 32

LN_EPS = 1e-5     # PyTorch nn.LayerNorm default
L2_EPS = 1e-12    # F.normalize default
TAU = 0.01        # soft_update_params coefficient

# net indices inside the stacked parameter arrays
FEAT, MU, T_FEAT, T_MU = 0, 1, 2, 3
NB = 4            # number of nets fused into the block-diagonal layout


# ------------------------- static constants (trace-time, numpy) -------------------------
def _build_loss_weights():
    """Weight masks for the merged reduction loss = sum(P^2*Wsq + P*Wlin).

    P rows (shape [3B, B]):
      rows 0:B   -> d   = SR - 0.98*target_SR
      rows B:2B  -> Cov = phi @ phi.T
      rows 2B:3B -> SR  = mu @ phi.T
    """
    n_off = float(B * B - B)
    wsq = np.zeros((3 * B, B), np.float32)
    wlin = np.zeros((3 * B, B), np.float32)
    for r in range(B):
        for c in range(B):
            if r != c:
                wsq[r, c] = 1.0 / n_off          # mean(offdiag(d)^2)
                wsq[B + r, c] = 1.0 / n_off      # mean(offdiag(Cov)^2)
            else:
                wlin[B + r, c] = -2.0 / B        # -2 * mean(diag(Cov))
                wlin[2 * B + r, c] = -2.0 / B    # -2 * mean(diag(SR))
    return np.concatenate([wsq, wlin], axis=0)   # [6B, B] = [48, 8]


_WTS = _build_loss_weights()


# ---------------------------------- kernel ----------------------------------
def svdsr_kernel(x_ref, w12_ref, aff_ref, w3b3_ref, wts_ref, loss_ref):
    """Fused forward: 4 MLPs as 3 block-diagonal matmuls + 1 tiny tail matmul + 1 reduce.

    Packed operand shapes:
      x     [4B, 4*OBS] = [32, 64]    block-diagonal inputs (next_obs, obs, next_obs, next_obs)
      w12   [4*OBS + 4*H, 4*H] = [192, 128]   rows 0:64 = W1_blk, rows 64:192 = W2_blk
      aff   [4B, 4 * 4*H] = [32, 512]  cols 0:128 b1 | 128:256 gamma | 256:384 beta | 384:512 b2
      w3b3  [4*H + 4B, 2*Z] = [160, 32]  rows 0:128 = W3_big, rows 128:160 = b3 (row-blocked)
      wts   [6B, B] = [48, 8]          rows 0:24 = Wsq, rows 24:48 = Wlin (static constants)
    """
    inv_h = 1.0 / float(HIDDEN)
    H4 = NB * HIDDEN            # 128
    IN4 = NB * OBS_DIM          # 64

    # ---- layer 1: Linear + LayerNorm + Tanh (all four nets in one matmul) ----
    h = jnp.dot(x_ref[...], w12_ref[0:IN4, :],
                preferred_element_type=jnp.float32) + aff_ref[:, 0:H4]
    s1 = jnp.sum(h, axis=-1, keepdims=True)            # off-block entries are exactly 0
    s2 = jnp.sum(h * h, axis=-1, keepdims=True)
    mean = s1 * inv_h
    var = s2 * inv_h - mean * mean
    h = (h - mean) * lax.rsqrt(var + LN_EPS)
    h = h * aff_ref[:, H4:2 * H4] + aff_ref[:, 2 * H4:3 * H4]   # gamma/beta 0 off-block
    h = jnp.tanh(h)

    # ---- layer 2: Linear + ReLU ----
    h = jnp.dot(h, w12_ref[IN4:IN4 + H4, :],
                preferred_element_type=jnp.float32) + aff_ref[:, 3 * H4:4 * H4]
    h = jnp.maximum(h, 0.0)

    # ---- layer 3: Linear ----
    z = jnp.dot(h, w3b3_ref[0:H4, :],
                preferred_element_type=jnp.float32) + w3b3_ref[H4:H4 + NB * B, :]

    # ---- L2 normalize phi / target_phi rows (EUP rsqrt), slice per-net rows ----
    ss = jnp.sum(z * z, axis=-1, keepdims=True)
    inv_norm = lax.rsqrt(jnp.maximum(ss, L2_EPS * L2_EPS))   # == 1 / max(||z||, eps)
    phi = z[0:B] * inv_norm[0:B]                     # cols 0:Z populated
    mu = z[B:2 * B]                                  # cols 0:Z populated
    t_phi = z[2 * B:3 * B] * inv_norm[2 * B:3 * B]   # cols Z:2Z populated
    t_mu = z[3 * B:4 * B]                            # cols Z:2Z populated

    # ---- tail: disjoint column blocks -> one NT matmul gives d / Cov / SR ----
    lhs = jnp.concatenate([mu - 0.98 * t_mu, phi, mu], axis=0)   # [3B, 2Z]
    rhs = phi + t_phi                                            # [B, 2Z]
    p = lax.dot_general(lhs, rhs, (((1,), (1,)), ((), ())),
                        preferred_element_type=jnp.float32)      # [3B, B]

    # ---- merged masked reduction -> scalar loss ----
    wsq = wts_ref[0:3 * B, :]
    wlin = wts_ref[3 * B:6 * B, :]
    loss_ref[0, 0] = jnp.sum(p * p * wsq + p * wlin)


# ---------------------------------- wrapper ----------------------------------
@jax.jit
def svdsr_forward(obs, next_obs, params):
    """params: dict of stacked arrays [4, ...] (feature, mu, target_feature, target_mu).

    Returns (loss, new_params) where new_params has the target nets soft-updated (tau=0.01).
    All block-diagonal / lane-dense operand packing is plain-JAX layout plumbing done once
    here, outside the hot kernel; everything is packed into 5 VMEM operands.
    """
    f32 = jnp.float32

    def block_diag(m):  # m: [NB, r, c] -> [NB*r, NB*c]
        r, c = m.shape[1], m.shape[2]
        out = jnp.zeros((NB * r, NB * c), f32)
        for i in range(NB):
            out = out.at[i * r:(i + 1) * r, i * c:(i + 1) * c].set(m[i])
        return out

    def row_blocks(v, total_cols, col_off):  # v: [NB, 1, w] -> [NB*B, total_cols]
        w = v.shape[-1]
        out = jnp.zeros((NB * B, total_cols), f32)
        for i in range(NB):
            out = out.at[i * B:(i + 1) * B, col_off[i]:col_off[i] + w].set(
                jnp.broadcast_to(v[i], (B, w)))
        return out

    h_off = tuple(i * HIDDEN for i in range(NB))
    z_off = (0, 0, Z_DIM, Z_DIM)   # phi & mu share cols 0:Z ; t_phi & t_mu share Z:2Z

    # one stacked weight operand per DMA
    w12 = jnp.concatenate([block_diag(params["w1"]),      # [64, 128]
                           block_diag(params["w2"])],     # [128, 128]
                          axis=0)                          # -> [192, 128]
    aff = jnp.concatenate([row_blocks(params["b1"], NB * HIDDEN, h_off),
                           row_blocks(params["g1"], NB * HIDDEN, h_off),
                           row_blocks(params["be1"], NB * HIDDEN, h_off),
                           row_blocks(params["b2"], NB * HIDDEN, h_off)],
                          axis=1)                          # -> [32, 512]
    w3_big = jnp.zeros((NB * HIDDEN, 2 * Z_DIM), f32)      # [128, 32]
    for i in range(NB):
        w3_big = w3_big.at[i * HIDDEN:(i + 1) * HIDDEN,
                           z_off[i]:z_off[i] + Z_DIM].set(params["w3"][i])
    w3b3 = jnp.concatenate([w3_big,
                            row_blocks(params["b3"], 2 * Z_DIM, z_off)],
                           axis=0)                         # -> [160, 32]

    # Block-diagonal inputs: feature/target nets see next_obs, mu_net sees obs.
    x_blk = jnp.zeros((NB * B, NB * OBS_DIM), f32)
    net_in = (next_obs, obs, next_obs, next_obs)
    for i in range(NB):
        x_blk = x_blk.at[i * B:(i + 1) * B,
                         i * OBS_DIM:(i + 1) * OBS_DIM].set(net_in[i])

    wts = jnp.asarray(_WTS)                                # [48, 8] static masks

    vmem = pl.BlockSpec(memory_space=pltpu.MemorySpace.VMEM)
    args = (x_blk, w12, aff, w3b3, wts)
    loss = pl.pallas_call(
        svdsr_kernel,
        out_shape=jax.ShapeDtypeStruct((1, 1), jnp.float32),
        in_specs=[vmem] * len(args),
        out_specs=pl.BlockSpec(memory_space=pltpu.MemorySpace.SMEM),
    )(*args)[0, 0]

    # soft_update_params(feature_net -> target_feature_net, 0.01) and
    # soft_update_params(mu_net -> target_mu_net, 0.01): parameter EMA side effect.
    # Kept as plain vectorized JAX because the kernel consumes the params in a fused
    # block-diagonal layout (aliasing the raw stacked params in-kernel would require
    # passing every parameter twice).
    new_params = {}
    for k, v in params.items():
        src = v[:2]                        # [feature, mu]
        tgt = v[2:]                        # [target_feature, target_mu]
        new_params[k] = jnp.concatenate([src, TAU * src + (1.0 - TAU) * tgt], axis=0)
    return loss, new_params


# ------------------------------ pure-JAX reference ------------------------------
def _ref_mlp(x, p, i, l2):
    h = x @ p["w1"][i] + p["b1"][i]
    mean = jnp.mean(h, axis=-1, keepdims=True)
    var = jnp.mean((h - mean) ** 2, axis=-1, keepdims=True)
    h = (h - mean) / jnp.sqrt(var + LN_EPS) * p["g1"][i] + p["be1"][i]
    h = jnp.tanh(h)
    h = jnp.maximum(h @ p["w2"][i] + p["b2"][i], 0.0)
    z = h @ p["w3"][i] + p["b3"][i]
    if l2:
        z = z / jnp.maximum(jnp.linalg.norm(z, axis=-1, keepdims=True), L2_EPS)
    return z


def ref_forward(obs, next_obs, p):
    phi = _ref_mlp(next_obs, p, FEAT, True)
    mu = _ref_mlp(obs, p, MU, False)
    t_phi = _ref_mlp(next_obs, p, T_FEAT, True)
    t_mu = _ref_mlp(next_obs, p, T_MU, False)
    SR = mu @ phi.T
    tSR = t_mu @ t_phi.T
    Cov = phi @ phi.T
    n = SR.shape[0]
    eye = jnp.eye(n)
    off = 1.0 - eye
    n_off = n * n - n
    loss = (-2.0 * jnp.trace(SR) / n
            + jnp.sum(((SR - 0.98 * tSR) * off) ** 2) / n_off
            + jnp.sum((Cov * off) ** 2) / n_off
            - 2.0 * jnp.trace(Cov) / n)
    return loss


# ---------------------------------- setup ----------------------------------
def init_params(key):
    """Deterministic init mirroring utils.weight_init: orthogonal Linear weights, zero bias,
    LayerNorm gamma=1 / beta=0. Weights stored as [in, out] (PyTorch is [out, in], x @ W.T)."""
    ortho = jax.nn.initializers.orthogonal()
    keys = jax.random.split(key, 12)
    w1 = jnp.stack([ortho(keys[i], (OBS_DIM, HIDDEN), jnp.float32) for i in range(4)])
    w2 = jnp.stack([ortho(keys[4 + i], (HIDDEN, HIDDEN), jnp.float32) for i in range(4)])
    w3 = jnp.stack([ortho(keys[8 + i], (HIDDEN, Z_DIM), jnp.float32) for i in range(4)])
    return {
        "w1": w1,
        "b1": jnp.zeros((4, 1, HIDDEN), jnp.float32),
        "g1": jnp.ones((4, 1, HIDDEN), jnp.float32),
        "be1": jnp.zeros((4, 1, HIDDEN), jnp.float32),
        "w2": w2,
        "b2": jnp.zeros((4, 1, HIDDEN), jnp.float32),
        "w3": w3,
        "b3": jnp.zeros((4, 1, Z_DIM), jnp.float32),
    }


if __name__ == "__main__":
    key = jax.random.PRNGKey(0)
    k_obs, k_nobs, k_act, k_par = jax.random.split(key, 4)
    obs = jax.random.normal(k_obs, (B, OBS_DIM), jnp.float32)
    next_obs = jax.random.normal(k_nobs, (B, OBS_DIM), jnp.float32)
    action = jax.random.normal(k_act, (B, ACTION_DIM), jnp.float32)  # unused by forward
    params = init_params(k_par)

    loss, new_params = svdsr_forward(obs, next_obs, params)
    loss = jax.block_until_ready(loss)
    jax.block_until_ready(new_params)

    loss_ref = jax.block_until_ready(ref_forward(obs, next_obs, params))
    assert jnp.isfinite(loss), "loss is not finite"
    assert jnp.allclose(loss, loss_ref, rtol=1e-4, atol=1e-4), (loss, loss_ref)

    print("KERNEL_OK")
</pallas_src>

<mosaic_0001>
module attributes {stable_mosaic.version = 11 : i64} {
  func.func @svdsr_kernel(%arg0: memref<32x64xf32, #tpu.memory_space<vmem>>, %arg1: memref<192x128xf32, #tpu.memory_space<vmem>>, %arg2: memref<32x512xf32, #tpu.memory_space<vmem>>, %arg3: memref<160x32xf32, #tpu.memory_space<vmem>>, %arg4: memref<48x8xf32, #tpu.memory_space<vmem>>, %arg5: memref<1x1xf32, #tpu.memory_space<smem>>) attributes {dimension_semantics = [], scalar_prefetch = 0 : i64, scratch_operands = 0 : i64, tpu.core_type = #tpu.core_type<tc>} {
    %c0 = arith.constant 0 : index
    %c0_0 = arith.constant 0 : index
    %0 = vector.load %arg0[%c0, %c0_0] : memref<32x64xf32, #tpu.memory_space<vmem>>, vector<32x64xf32>
    %c0_1 = arith.constant 0 : index
    %c0_2 = arith.constant 0 : index
    %1 = vector.load %arg1[%c0_1, %c0_2] : memref<192x128xf32, #tpu.memory_space<vmem>>, vector<64x128xf32>
    %cst = arith.constant dense<0.000000e+00> : vector<32x128xf32>
    %2 = tpu.matmul %0, %1, %cst {dimension_numbers = #tpu.dot_dimension_numbers<[1], [0], [0], [1], [0, 0, 1, 1], [], []>} : vector<32x64xf32>, vector<64x128xf32>, vector<32x128xf32> -> vector<32x128xf32>
    %c0_3 = arith.constant 0 : index
    %c0_4 = arith.constant 0 : index
    %3 = vector.load %arg2[%c0_3, %c0_4] : memref<32x512xf32, #tpu.memory_space<vmem>>, vector<32x128xf32>
    %4 = arith.addf %2, %3 : vector<32x128xf32>
    %cst_5 = arith.constant dense<0.000000e+00> : vector<32xf32>
    %5 = vector.multi_reduction <add>, %4, %cst_5 [1] : vector<32x128xf32> to vector<32xf32>
    %6 = vector.shape_cast %5 : vector<32xf32> to vector<32x1xf32>
    %7 = arith.mulf %4, %4 : vector<32x128xf32>
    %cst_6 = arith.constant dense<0.000000e+00> : vector<32xf32>
    %8 = vector.multi_reduction <add>, %7, %cst_6 [1] : vector<32x128xf32> to vector<32xf32>
    %9 = vector.shape_cast %8 : vector<32xf32> to vector<32x1xf32>
    %cst_7 = arith.constant 3.125000e-02 : f32
    %10 = vector.broadcast %cst_7 : f32 to vector<32x1xf32>
    %11 = arith.mulf %6, %10 : vector<32x1xf32>
    %cst_8 = arith.constant 3.125000e-02 : f32
    %12 = vector.broadcast %cst_8 : f32 to vector<32x1xf32>
    %13 = arith.mulf %9, %12 : vector<32x1xf32>
    %14 = arith.mulf %11, %11 : vector<32x1xf32>
    %15 = arith.subf %13, %14 : vector<32x1xf32>
    %16 = vector.broadcast %11 : vector<32x1xf32> to vector<32x128xf32>
    %17 = arith.subf %4, %16 : vector<32x128xf32>
    %cst_9 = arith.constant 9.99999974E-6 : f32
    %18 = vector.broadcast %cst_9 : f32 to vector<32x1xf32>
    %19 = arith.addf %15, %18 : vector<32x1xf32>
    %20 = math.rsqrt %19 : vector<32x1xf32>
    %21 = vector.broadcast %20 : vector<32x1xf32> to vector<32x128xf32>
    %22 = arith.mulf %17, %21 : vector<32x128xf32>
    %c0_10 = arith.constant 0 : index
    %c128 = arith.constant 128 : index
    %23 = vector.load %arg2[%c0_10, %c128] : memref<32x512xf32, #tpu.memory_space<vmem>>, vector<32x128xf32>
    %24 = arith.mulf %22, %23 : vector<32x128xf32>
    %c0_11 = arith.constant 0 : index
    %c256 = arith.constant 256 : index
    %25 = vector.load %arg2[%c0_11, %c256] : memref<32x512xf32, #tpu.memory_space<vmem>>, vector<32x128xf32>
    %26 = arith.addf %24, %25 : vector<32x128xf32>
    %27 = math.tanh %26 : vector<32x128xf32>
    %c64 = arith.constant 64 : index
    %c0_12 = arith.constant 0 : index
    %28 = vector.load %arg1[%c64, %c0_12] : memref<192x128xf32, #tpu.memory_space<vmem>>, vector<128x128xf32>
    %cst_13 = arith.constant dense<0.000000e+00> : vector<32x128xf32>
    %29 = tpu.matmul %27, %28, %cst_13 {dimension_numbers = #tpu.dot_dimension_numbers<[1], [0], [0], [1], [0, 0, 1, 1], [], []>} : vector<32x128xf32>, vector<128x128xf32>, vector<32x128xf32> -> vector<32x128xf32>
    %c0_14 = arith.constant 0 : index
    %c384 = arith.constant 384 : index
    %30 = vector.load %arg2[%c0_14, %c384] : memref<32x512xf32, #tpu.memory_space<vmem>>, vector<32x128xf32>
    %31 = arith.addf %29, %30 : vector<32x128xf32>
    %cst_15 = arith.constant 0.000000e+00 : f32
    %32 = vector.broadcast %cst_15 : f32 to vector<32x128xf32>
    %33 = arith.maximumf %31, %32 : vector<32x128xf32>
    %c0_16 = arith.constant 0 : index
    %c0_17 = arith.constant 0 : index
    %34 = vector.load %arg3[%c0_16, %c0_17] : memref<160x32xf32, #tpu.memory_space<vmem>>, vector<128x32xf32>
    %cst_18 = arith.constant dense<0.000000e+00> : vector<32x32xf32>
    %35 = tpu.matmul %33, %34, %cst_18 {dimension_numbers = #tpu.dot_dimension_numbers<[1], [0], [0], [1], [0, 0, 1, 1], [], []>} : vector<32x128xf32>, vector<128x32xf32>, vector<32x32xf32> -> vector<32x32xf32>
    %c128_19 = arith.constant 128 : index
    %c0_20 = arith.constant 0 : index
    %36 = vector.load %arg3[%c128_19, %c0_20] : memref<160x32xf32, #tpu.memory_space<vmem>>, vector<32x32xf32>
    %37 = arith.addf %35, %36 : vector<32x32xf32>
    %38 = arith.mulf %37, %37 : vector<32x32xf32>
    %cst_21 = arith.constant dense<0.000000e+00> : vector<32xf32>
    %39 = vector.multi_reduction <add>, %38, %cst_21 [1] : vector<32x32xf32> to vector<32xf32>
    %40 = vector.shape_cast %39 : vector<32xf32> to vector<32x1xf32>
    %cst_22 = arith.constant 1.000000e-24 : f32
    %41 = vector.broadcast %cst_22 : f32 to vector<32x1xf32>
    %42 = arith.maximumf %40, %41 : vector<32x1xf32>
    %43 = math.rsqrt %42 : vector<32x1xf32>
    %44 = vector.extract_strided_slice %37 {offsets = [0, 0], sizes = [8, 32], strides = [1, 1]} : vector<32x32xf32> to vector<8x32xf32>
    %45 = vector.extract_strided_slice %43 {offsets = [0, 0], sizes = [8, 1], strides = [1, 1]} : vector<32x1xf32> to vector<8x1xf32>
    %46 = vector.broadcast %45 : vector<8x1xf32> to vector<8x32xf32>
    %47 = arith.mulf %44, %46 : vector<8x32xf32>
    %48 = vector.extract_strided_slice %37 {offsets = [8, 0], sizes = [8, 32], strides = [1, 1]} : vector<32x32xf32> to vector<8x32xf32>
    %49 = vector.extract_strided_slice %37 {offsets = [16, 0], sizes = [8, 32], strides = [1, 1]} : vector<32x32xf32> to vector<8x32xf32>
    %50 = vector.extract_strided_slice %43 {offsets = [16, 0], sizes = [8, 1], strides = [1, 1]} : vector<32x1xf32> to vector<8x1xf32>
    %51 = vector.broadcast %50 : vector<8x1xf32> to vector<8x32xf32>
    %52 = arith.mulf %49, %51 : vector<8x32xf32>
    %53 = vector.extract_strided_slice %37 {offsets = [24, 0], sizes = [8, 32], strides = [1, 1]} : vector<32x32xf32> to vector<8x32xf32>
    %cst_23 = arith.constant 9.800000e-01 : f32
    %54 = vector.broadcast %cst_23 : f32 to vector<8x32xf32>
    %55 = arith.mulf %54, %53 : vector<8x32xf32>
    %56 = arith.subf %48, %55 : vector<8x32xf32>
    %57 = tpu.concatenate %56, %47, %48 in 0 : vector<8x32xf32>, vector<8x32xf32>, vector<8x32xf32> -> vector<24x32xf32>
    %58 = arith.addf %47, %52 : vector<8x32xf32>
    %cst_24 = arith.constant dense<0.000000e+00> : vector<24x8xf32>
    %59 = tpu.matmul %57, %58, %cst_24 {dimension_numbers = #tpu.dot_dimension_numbers<[1], [1], [0], [0], [0, 0, 1, 0], [], []>} : vector<24x32xf32>, vector<8x32xf32>, vector<24x8xf32> -> vector<24x8xf32>
    %c0_25 = arith.constant 0 : index
    %c0_26 = arith.constant 0 : index
    %60 = vector.load %arg4[%c0_25, %c0_26] : memref<48x8xf32, #tpu.memory_space<vmem>>, vector<24x8xf32>
    %c24 = arith.constant 24 : index
    %c0_27 = arith.constant 0 : index
    %61 = vector.load %arg4[%c24, %c0_27] : memref<48x8xf32, #tpu.memory_space<vmem>>, vector<24x8xf32>
    %62 = arith.mulf %59, %59 : vector<24x8xf32>
    %63 = arith.mulf %62, %60 : vector<24x8xf32>
    %64 = arith.mulf %59, %61 : vector<24x8xf32>
    %65 = arith.addf %63, %64 : vector<24x8xf32>
    %66 = vector.shape_cast %65 : vector<24x8xf32> to vector<1x24x8xf32>
    %cst_28 = arith.constant dense<0.000000e+00> : vector<1xf32>
    %67 = vector.multi_reduction <add>, %66, %cst_28 [1, 2] : vector<1x24x8xf32> to vector<1xf32>
    %68 = vector.shape_cast %67 : vector<1xf32> to vector<1x1x1xf32>
    %69 = vector.extract %68[0, 0, 0] : f32 from vector<1x1x1xf32>
    %c0_29 = arith.constant 0 : index
    %c0_30 = arith.constant 0 : index
    %70 = memref.load %arg5[%c0_29, %c0_30] : memref<1x1xf32, #tpu.memory_space<smem>>
    memref.store %69, %arg5[%c0_29, %c0_30] : memref<1x1xf32, #tpu.memory_space<smem>>
    return
  }
}

</mosaic_0001>

<llo_original>
// kernel: svdsr_forward.1
$region0: #{svdsr_forward.1}
  #allocation0 [shape = 'u32[]', space=smem, size = 0x4, offset = 0x4, fixed_abs, tag = 'smem constant byte address 0x4 - core index']
  #allocation1 [shape = 'u32[144,128]{1,0:T(1,128)}', space=vmem, size = 0x12000, scoped, tag = 'internal scratch']
  %s0 = inlined_call_operand.vmem [shape: f32[32,64], index: 0, kind: input, shape index: {}]
  %s1 = inlined_call_operand.vmem [shape: f32[192,128], index: 1, kind: input, shape index: {}]
  %s2 = inlined_call_operand.vmem [shape: f32[32,512], index: 2, kind: input, shape index: {}]
  %s3 = inlined_call_operand.vmem [shape: f32[160,32], index: 3, kind: input, shape index: {}]
  %s4 = inlined_call_operand.vmem [shape: f32[48,8], index: 4, kind: input, shape index: {}]
  %s5 = inlined_call_operand.hbm [shape: f32[1,1], index: 5, kind: output, shape index: {}]
  %s6 = sld [smem:[#allocation0]]
  $region30: #{svdsr_forward.1} parent=0
    _
  %s8 = ssub.s32 1, %s6
  %s9 = scalar_select 0, %s8, %s6
  $region1: #{svdsr_forward.1} parent=0
    #allocation2 [shape = 'u8[512]{0}', space=smem, size = 0x200, scoped, tag = 'output window, operand 0, single buffered']
    #allocation3 [shape = 's32[1]{0}', space=sflag, size = 0x4, scoped, tag = 'scoped memory for svdsr_forward.1']
    %10 = vsyncpa [#allocation3], 0
    // Predicated region
    $region2: #{svdsr_forward.1} parent=1 // pred_check
      _
    $region3: #{svdsr_forward.1} parent=1 // pred_check_branch
      %12 = sbr.rel (0) target = $region5
    $region4: #{svdsr_forward.1} parent=1 // pred_region
      _
    $region5: #{svdsr_forward.1} parent=1 // pred_fallthru
      _
    // Predicated region
    $region6: #{svdsr_forward.1} parent=1 // pred_check
      _
    $region7: #{svdsr_forward.1} parent=1 // pred_check_branch
      %14 = sbr.rel (0) target = $region9
    $region8: #{svdsr_forward.1} parent=1 // pred_region
      _
    $region9: #{svdsr_forward.1} parent=1 // pred_fallthru
      _
    // Predicated region
    $region10: #{svdsr_forward.1} parent=1 // pred_check
      _
    $region11: #{svdsr_forward.1} parent=1 // pred_check_branch
      %16 = sbr.rel (0) target = $region13
    $region12: #{svdsr_forward.1} parent=1 // pred_region
      _
    $region13: #{svdsr_forward.1} parent=1 // pred_fallthru
      _
    // Predicated region
    $region14: #{svdsr_forward.1} parent=1 // pred_check
      _
    $region15: #{svdsr_forward.1} parent=1 // pred_check_branch
      %18 = sbr.rel (0) target = $region17
    $region16: #{svdsr_forward.1} parent=1 // pred_region
      _
    $region17: #{svdsr_forward.1} parent=1 // pred_fallthru
      _
    // Predicated region
    $region18: #{svdsr_forward.1} parent=1 // pred_check
      _
    $region19: #{svdsr_forward.1} parent=1 // pred_check_branch
      %20 = sbr.rel (0) target = $region21
    $region20: #{svdsr_forward.1} parent=1 // pred_region
      _
    $region21: #{svdsr_forward.1} parent=1 // pred_fallthru
      _
    %v21 = vld [vmem:[%s0] sm:$0xff]
    %v22 = vld [vmem:[%s0 + $0x8] sm:$0xff]
    %v23 = vld [vmem:[%s0 + $0x10] sm:$0xff]
    %v24 = vld [vmem:[%s0 + $0x18] sm:$0xff]
    %v25 = vld [vmem:[%s1] sm:$0xff]
    %v26 = vld [vmem:[%s1 + $0x8] sm:$0xff]
    %v27 = vld [vmem:[%s1 + $0x10] sm:$0xff]
    %v28 = vld [vmem:[%s1 + $0x18] sm:$0xff]
    %v29 = vld [vmem:[%s1 + $0x20] sm:$0xff]
    %v30 = vld [vmem:[%s1 + $0x28] sm:$0xff]
    %v31 = vld [vmem:[%s1 + $0x30] sm:$0xff]
    %v32 = vld [vmem:[%s1 + $0x38] sm:$0xff]
    %v33 = vld [vmem:[%s2] sm:$0xff]
    %v34 = vld [vmem:[%s2 + $0x20] sm:$0xff]
    %v35 = vld [vmem:[%s2 + $0x40] sm:$0xff]
    %v36 = vld [vmem:[%s2 + $0x60] sm:$0xff]
    %vm37 = vcmask 523264
    %v39 = vsel %vm37, %v21, 0
    %v42 = vsel %vm37, %v22, 0
    %v45 = vsel %vm37, %v23, 0
    %v48 = vsel %vm37, %v24, 0
    %50 = vmatprep.subr.mxu0 0.0
    %51 = vmatpush1.msra.mxu0 %v25
    %52 = vmatprep.subr.mxu0 0.0
    %53 = vmatpush1.msra.mxu0 %v26
    %54 = vmatprep.subr.mxu0 0.0
    %55 = vmatpush1.msra.mxu0 %v27
    %56 = vmatprep.subr.mxu0 0.0
    %57 = vmatpush1.msra.mxu0 %v28
    %58 = vmatprep.subr.mxu0 0.0
    %59 = vmatpush1.msra.mxu0 %v29
    %60 = vmatprep.subr.mxu0 0.0
    %61 = vmatpush1.msra.mxu0 %v30
    %62 = vmatprep.subr.mxu0 0.0
    %63 = vmatpush1.msra.mxu0 %v31
    %64 = vmatprep.subr.mxu0 0.0
    %65 = vmatpush1.msra.mxu0 %v32
    %66 = vmatprep.subr.mxu0 0.0
    %67 = vmatpush1.msra.mxu0 0.0
    %68 = vmatprep.subr.mxu0 0.0
    %69 = vmatpush1.msra.mxu0 0.0
    %70 = vmatprep.subr.mxu0 0.0
    %71 = vmatpush1.msra.mxu0 0.0
    %72 = vmatprep.subr.mxu0 0.0
    %73 = vmatpush1.msra.mxu0 0.0
    %74 = vmatprep.subr.mxu0 0.0
    %75 = vmatpush1.msra.mxu0 0.0
    %76 = vmatprep.subr.mxu0 0.0
    %77 = vmatpush1.msra.mxu0 0.0
    %78 = vmatprep.subr.mxu0 0.0
    %79 = vmatpush1.msra.mxu0 0.0
    %80 = vmatprep.subr.mxu0 0.0
    %81 = vmatpush1.msra.mxu0 0.0
    %82 = vmatprep.subr.mxu0 0.0
    %83 = vmatpush1.msra.mxu0 0.0
    %84 = vmatprep.subr.mxu0 0.0
    %85 = vmatpush1.msra.mxu0 0.0
    %86 = vmatprep.subr.mxu0 0.0
    %87 = vmatpush1.msra.mxu0 0.0
    %88 = vmatprep.subr.mxu0 0.0
    %89 = vmatpush1.msra.mxu0 0.0
    %90 = vmatprep.subr.mxu0 0.0
    %91 = vmatpush1.msra.mxu0 0.0
    %92 = vmatprep.subr.mxu0 0.0
    %93 = vmatpush1.msra.mxu0 0.0
    %94 = vmatprep.subr.mxu0 0.0
    %95 = vmatpush1.msra.mxu0 0.0
    %96 = vmatprep.subr.mxu0 0.0
    %97 = vmatpush1.msra.mxu0 0.0
    %98 = vmatprep.subr.mxu0 0.0
    %99 = vmatpush1.msra.mxu0 0.0
    %100 = vmatprep.subr.mxu0 0.0
    %101 = vmatpush1.msra.mxu0 0.0
    %102 = vmatprep.subr.mxu0 0.0
    %103 = vmatpush1.msra.mxu0 0.0
    %104 = vmatprep.subr.mxu0 0.0
    %105 = vmatpush1.msra.mxu0 0.0
    %106 = vmatprep.subr.mxu0 0.0
    %107 = vmatpush1.msra.mxu0 0.0
    %108 = vmatprep.subr.mxu0 0.0
    %109 = vmatpush1.msra.mxu0 0.0
    %110 = vmatprep.subr.mxu0 0.0
    %111 = vmatpush1.msra.mxu0 0.0
    %112 = vmatprep.subr.mxu0 0.0
    %113 = vmatpush1.msra.mxu0 0.0
    %114 = vmatprep.mubr.f32.mxu0 0.0
    %115 = vmatmul.mubr.f32.gmra.mrb[0].mxu0 %v39
    %v116 = vpop.f32.mrb[0].mxu0
    %v117 = vadd.f32 %v33, %v116
    %v118 = vpop.f32.mrb[0].mxu0
    %119 = vmatprep.mubr.f32.mxu0 0.0
    %120 = vmatmul.mubr.f32.gmra.mrb[0].mxu0 %v42
    %v121 = vpop.f32.mrb[0].mxu0
    %v122 = vadd.f32 %v34, %v121
    %v123 = vpop.f32.mrb[0].mxu0
    %124 = vmatprep.mubr.f32.mxu0 0.0
    %125 = vmatmul.mubr.f32.gmra.mrb[0].mxu0 %v45
    %v126 = vpop.f32.mrb[0].mxu0
    %v127 = vadd.f32 %v35, %v126
    %v128 = vpop.f32.mrb[0].mxu0
    %129 = vmatprep.mubr.f32.mxu0 0.0
    %130 = vmatmul.mubr.f32.gmra.mrb[0].mxu0 %v48
    %v131 = vpop.f32.mrb[0].mxu0
    %v132 = vadd.f32 %v36, %v131
    %v133 = vpop.f32.mrb[0].mxu0
    %134 = vdwg.mxu0
    %135 = vadd.xlane.f32.xlu0 %v117
    %v136 = vpop.xlane.xlu0 %135
    %137 = vadd.xlane.f32.xlu0 %v122
    %v138 = vpop.xlane.xlu0 %137
    %139 = vadd.xlane.f32.xlu0 %v127
    %v140 = vpop.xlane.xlu0 %139
    %141 = vadd.xlane.f32.xlu0 %v132
    %v142 = vpop.xlane.xlu0 %141
    %v143 = vmul.f32 %v117, %v117
    %v144 = vmul.f32 %v122, %v122
    %v145 = vmul.f32 %v127, %v127
    %v146 = vmul.f32 %v132, %v132
    %147 = vadd.xlane.f32.xlu0 %v143
    %v148 = vpop.xlane.xlu0 %147
    %149 = vadd.xlane.f32.xlu0 %v144
    %v150 = vpop.xlane.xlu0 %149
    %151 = vadd.xlane.f32.xlu0 %v145
    %v152 = vpop.xlane.xlu0 %151
    %153 = vadd.xlane.f32.xlu0 %v146
    %v154 = vpop.xlane.xlu0 %153
    %v155 = vmul.f32 %v136, 0.03125
    %v156 = vmul.f32 %v138, 0.03125
    %v157 = vmul.f32 %v140, 0.03125
    %v158 = vmul.f32 %v142, 0.03125
    %v159 = vmul.f32 %v148, 0.03125
    %v160 = vmul.f32 %v150, 0.03125
    %v161 = vmul.f32 %v152, 0.03125
    %v162 = vmul.f32 %v154, 0.03125
    %v163 = vmul.f32 %v155, %v155
    %v164 = vmul.f32 %v156, %v156
    %v165 = vmul.f32 %v157, %v157
    %v166 = vmul.f32 %v158, %v158
    %v167 = vsub.f32 %v159, %v163
    %v168 = vsub.f32 %v160, %v164
    %v169 = vsub.f32 %v161, %v165
    %v170 = vsub.f32 %v162, %v166
    %v171 = vsub.f32 %v117, %v155
    %v172 = vsub.f32 %v122, %v156
    %v173 = vsub.f32 %v127, %v157
    %v174 = vsub.f32 %v132, %v158
    %v175 = vadd.f32 %v167, 1e-05
    %v176 = vadd.f32 %v168, 1e-05
    %v177 = vadd.f32 %v169, 1e-05
    %v178 = vadd.f32 %v170, 1e-05
    %v179 = vrsqrt.pop %v175
    %v180 = vrsqrt.pop %v176
    %v181 = vrsqrt.pop %v177
    %v182 = vrsqrt.pop %v178
    %v183 = vmul.f32 %v171, %v179
    %v184 = vmul.f32 %v172, %v180
    %v185 = vmul.f32 %v173, %v181
    %v186 = vmul.f32 %v174, %v182
    %v187 = vld [vmem:[%s2 + $0x8] sm:$0xff]
    %v188 = vld [vmem:[%s2 + $0x28] sm:$0xff]
    %v189 = vld [vmem:[%s2 + $0x48] sm:$0xff]
    %v190 = vld [vmem:[%s2 + $0x68] sm:$0xff]
    %v191 = vmul.f32 %v183, %v187
    %v192 = vmul.f32 %v184, %v188
    %v193 = vmul.f32 %v185, %v189
    %v194 = vmul.f32 %v186, %v190
    %v195 = vld [vmem:[%s2 + $0x10] sm:$0xff]
    %v196 = vld [vmem:[%s2 + $0x30] sm:$0xff]
    %v197 = vld [vmem:[%s2 + $0x50] sm:$0xff]
    %v198 = vld [vmem:[%s2 + $0x70] sm:$0xff]
    %v199 = vadd.f32 %v191, %v195
    %v200 = vadd.f32 %v192, %v196
    %v201 = vadd.f32 %v193, %v197
    %v202 = vadd.f32 %v194, %v198
    %v203 = vtanh.pop %v199
    %v204 = vtanh.pop %v200
    %v205 = vtanh.pop %v201
    %v206 = vtanh.pop %v202
    %v207 = vld [vmem:[%s1 + $0x40] sm:$0xff]
    %v208 = vld [vmem:[%s1 + $0x48] sm:$0xff]
    %v209 = vld [vmem:[%s1 + $0x50] sm:$0xff]
    %v210 = vld [vmem:[%s1 + $0x58] sm:$0xff]
    %v211 = vld [vmem:[%s1 + $0x60] sm:$0xff]
    %v212 = vld [vmem:[%s1 + $0x68] sm:$0xff]
    %v213 = vld [vmem:[%s1 + $0x70] sm:$0xff]
    %v214 = vld [vmem:[%s1 + $0x78] sm:$0xff]
    %v215 = vld [vmem:[%s1 + $0x80] sm:$0xff]
    %v216 = vld [vmem:[%s1 + $0x88] sm:$0xff]
    %v217 = vld [vmem:[%s1 + $0x90] sm:$0xff]
    %v218 = vld [vmem:[%s1 + $0x98] sm:$0xff]
    %v219 = vld [vmem:[%s1 + $0xa0] sm:$0xff]
    %v220 = vld [vmem:[%s1 + $0xa8] sm:$0xff]
    %v221 = vld [vmem:[%s1 + $0xb0] sm:$0xff]
    %v222 = vld [vmem:[%s1 + $0xb8] sm:$0xff]
    %v223 = vld [vmem:[%s2 + $0x18] sm:$0xff]
    %v224 = vld [vmem:[%s2 + $0x38] sm:$0xff]
    %v225 = vld [vmem:[%s2 + $0x58] sm:$0xff]
    %v226 = vld [vmem:[%s2 + $0x78] sm:$0xff]
    %227 = vmatprep.subr.mxu0 0.0
    %228 = vmatpush1.msra.mxu0 %v207
    %229 = vmatprep.subr.mxu0 0.0
    %230 = vmatpush1.msra.mxu0 %v208
    %231 = vmatprep.subr.mxu0 0.0
    %232 = vmatpush1.msra.mxu0 %v209
    %233 = vmatprep.subr.mxu0 0.0
    %234 = vmatpush1.msra.mxu0 %v210
    %235 = vmatprep.subr.mxu0 0.0
    %236 = vmatpush1.msra.mxu0 %v211
    %237 = vmatprep.subr.mxu0 0.0
    %238 = vmatpush1.msra.mxu0 %v212
    %239 = vmatprep.subr.mxu0 0.0
    %240 = vmatpush1.msra.mxu0 %v213
    %241 = vmatprep.subr.mxu0 0.0
    %242 = vmatpush1.msra.mxu0 %v214
    %243 = vmatprep.subr.mxu0 0.0
    %244 = vmatpush1.msra.mxu0 %v215
    %245 = vmatprep.subr.mxu0 0.0
    %246 = vmatpush1.msra.mxu0 %v216
    %247 = vmatprep.subr.mxu0 0.0
    %248 = vmatpush1.msra.mxu0 %v217
    %249 = vmatprep.subr.mxu0 0.0
    %250 = vmatpush1.msra.mxu0 %v218
    %251 = vmatprep.subr.mxu0 0.0
    %252 = vmatpush1.msra.mxu0 %v219
    %253 = vmatprep.subr.mxu0 0.0
    %254 = vmatpush1.msra.mxu0 %v220
    %255 = vmatprep.subr.mxu0 0.0
    %256 = vmatpush1.msra.mxu0 %v221
    %257 = vmatprep.subr.mxu0 0.0
    %258 = vmatpush1.msra.mxu0 %v222
    %259 = vmatprep.subr.mxu0 0.0
    %260 = vmatpush1.msra.mxu0 0.0
    %261 = vmatprep.subr.mxu0 0.0
    %262 = vmatpush1.msra.mxu0 0.0
    %263 = vmatprep.subr.mxu0 0.0
    %264 = vmatpush1.msra.mxu0 0.0
    %265 = vmatprep.subr.mxu0 0.0
    %266 = vmatpush1.msra.mxu0 0.0
    %267 = vmatprep.subr.mxu0 0.0
    %268 = vmatpush1.msra.mxu0 0.0
    %269 = vmatprep.subr.mxu0 0.0
    %270 = vmatpush1.msra.mxu0 0.0
    %271 = vmatprep.subr.mxu0 0.0
    %272 = vmatpush1.msra.mxu0 0.0
    %273 = vmatprep.subr.mxu0 0.0
    %274 = vmatpush1.msra.mxu0 0.0
    %275 = vmatprep.subr.mxu0 0.0
    %276 = vmatpush1.msra.mxu0 0.0
    %277 = vmatprep.subr.mxu0 0.0
    %278 = vmatpush1.msra.mxu0 0.0
    %279 = vmatprep.subr.mxu0 0.0
    %280 = vmatpush1.msra.mxu0 0.0
    %281 = vmatprep.subr.mxu0 0.0
    %282 = vmatpush1.msra.mxu0 0.0
    %283 = vmatprep.subr.mxu0 0.0
    %284 = vmatpush1.msra.mxu0 0.0
    %285 = vmatprep.subr.mxu0 0.0
    %286 = vmatpush1.msra.mxu0 0.0
    %287 = vmatprep.subr.mxu0 0.0
    %288 = vmatpush1.msra.mxu0 0.0
    %289 = vmatprep.subr.mxu0 0.0
    %290 = vmatpush1.msra.mxu0 0.0
    %291 = vmatprep.mubr.f32.mxu0 0.0
    %292 = vmatmul.mubr.f32.gmra.mrb[0].mxu0 %v203
    %v293 = vpop.f32.mrb[0].mxu0
    %v294 = vadd.f32 %v223, %v293
    %v295 = vpop.f32.mrb[0].mxu0
    %296 = vmatprep.mubr.f32.mxu0 0.0
    %297 = vmatmul.mubr.f32.gmra.mrb[0].mxu0 %v204
    %v298 = vpop.f32.mrb[0].mxu0
    %v299 = vadd.f32 %v224, %v298
    %v300 = vpop.f32.mrb[0].mxu0
    %301 = vmatprep.mubr.f32.mxu0 0.0
    %302 = vmatmul.mubr.f32.gmra.mrb[0].mxu0 %v205
    %v303 = vpop.f32.mrb[0].mxu0
    %v304 = vadd.f32 %v225, %v303
    %v305 = vpop.f32.mrb[0].mxu0
    %306 = vmatprep.mubr.f32.mxu0 0.0
    %307 = vmatmul.mubr.f32.gmra.mrb[0].mxu0 %v206
    %v308 = vpop.f32.mrb[0].mxu0
    %v309 = vadd.f32 %v226, %v308
    %v310 = vpop.f32.mrb[0].mxu0
    %311 = vdwg.mxu0
    %v312 = vmax.f32 %v294, 0.0
    %v313 = vmax.f32 %v299, 0.0
    %v314 = vmax.f32 %v304, 0.0
    %v315 = vmax.f32 %v309, 0.0
    %v316 = vld [vmem:[%s3] sm:$0xff]
    %v317 = vld [vmem:[%s3 + $0x8] sm:$0xff]
    %v318 = vld [vmem:[%s3 + $0x10] sm:$0xff]
    %v319 = vld [vmem:[%s3 + $0x18] sm:$0xff]
    %v320 = vld [vmem:[%s3 + $0x20] sm:$0xff]
    %v321 = vld [vmem:[%s3 + $0x28] sm:$0xff]
    %v322 = vld [vmem:[%s3 + $0x30] sm:$0xff]
    %v323 = vld [vmem:[%s3 + $0x38] sm:$0xff]
    %v324 = vld [vmem:[%s3 + $0x40] sm:$0xff]
    %v325 = vld [vmem:[%s3 + $0x48] sm:$0xff]
    %v326 = vld [vmem:[%s3 + $0x50] sm:$0xff]
    %v327 = vld [vmem:[%s3 + $0x58] sm:$0xff]
    %v328 = vld [vmem:[%s3 + $0x60] sm:$0xff]
    %v329 = vld [vmem:[%s3 + $0x68] sm:$0xff]
    %v330 = vld [vmem:[%s3 + $0x70] sm:$0xff]
    %v331 = vld [vmem:[%s3 + $0x78] sm:$0xff]
    %v332 = vld [vmem:[%s3 + $0x80] sm:$0xff]
    %v333 = vld [vmem:[%s3 + $0x88] sm:$0xff]
    %v334 = vld [vmem:[%s3 + $0x90] sm:$0xff]
    %v335 = vld [vmem:[%s3 + $0x98] sm:$0xff]
    %336 = vmatprep.subr.mxu0 0.0
    %337 = vmatpush1.msra.mxu0 %v316
    %338 = vmatprep.subr.mxu0 0.0
    %339 = vmatpush1.msra.mxu0 %v317
    %340 = vmatprep.subr.mxu0 0.0
    %341 = vmatpush1.msra.mxu0 %v318
    %342 = vmatprep.subr.mxu0 0.0
    %343 = vmatpush1.msra.mxu0 %v319
    %344 = vmatprep.subr.mxu0 0.0
    %345 = vmatpush1.msra.mxu0 %v320
    %346 = vmatprep.subr.mxu0 0.0
    %347 = vmatpush1.msra.mxu0 %v321
    %348 = vmatprep.subr.mxu0 0.0
    %349 = vmatpush1.msra.mxu0 %v322
    %350 = vmatprep.subr.mxu0 0.0
    %351 = vmatpush1.msra.mxu0 %v323
    %352 = vmatprep.subr.mxu0 0.0
    %353 = vmatpush1.msra.mxu0 %v324
    %354 = vmatprep.subr.mxu0 0.0
    %355 = vmatpush1.msra.mxu0 %v325
    %356 = vmatprep.subr.mxu0 0.0
    %357 = vmatpush1.msra.mxu0 %v326
    %358 = vmatprep.subr.mxu0 0.0
    %359 = vmatpush1.msra.mxu0 %v327
    %360 = vmatprep.subr.mxu0 0.0
    %361 = vmatpush1.msra.mxu0 %v328
    %362 = vmatprep.subr.mxu0 0.0
    %363 = vmatpush1.msra.mxu0 %v329
    %364 = vmatprep.subr.mxu0 0.0
    %365 = vmatpush1.msra.mxu0 %v330
    %366 = vmatprep.subr.mxu0 0.0
    %367 = vmatpush1.msra.mxu0 %v331
    %368 = vmatprep.subr.mxu0 0.0
    %369 = vmatpush1.msra.mxu0 0.0
    %370 = vmatprep.subr.mxu0 0.0
    %371 = vmatpush1.msra.mxu0 0.0
    %372 = vmatprep.subr.mxu0 0.0
    %373 = vmatpush1.msra.mxu0 0.0
    %374 = vmatprep.subr.mxu0 0.0
    %375 = vmatpush1.msra.mxu0 0.0
    %376 = vmatprep.subr.mxu0 0.0
    %377 = vmatpush1.msra.mxu0 0.0
    %378 = vmatprep.subr.mxu0 0.0
    %379 = vmatpush1.msra.mxu0 0.0
    %380 = vmatprep.subr.mxu0 0.0
    %381 = vmatpush1.msra.mxu0 0.0
    %382 = vmatprep.subr.mxu0 0.0
    %383 = vmatpush1.msra.mxu0 0.0
    %384 = vmatprep.subr.mxu0 0.0
    %385 = vmatpush1.msra.mxu0 0.0
    %386 = vmatprep.subr.mxu0 0.0
    %387 = vmatpush1.msra.mxu0 0.0
    %388 = vmatprep.subr.mxu0 0.0
    %389 = vmatpush1.msra.mxu0 0.0
    %390 = vmatprep.subr.mxu0 0.0
    %391 = vmatpush1.msra.mxu0 0.0
    %392 = vmatprep.subr.mxu0 0.0
    %393 = vmatpush1.msra.mxu0 0.0
    %394 = vmatprep.subr.mxu0 0.0
    %395 = vmatpush1.msra.mxu0 0.0
    %396 = vmatprep.subr.mxu0 0.0
    %397 = vmatpush1.msra.mxu0 0.0
    %398 = vmatprep.subr.mxu0 0.0
    %399 = vmatpush1.msra.mxu0 0.0
    %400 = vmatprep.mubr.f32.mxu0 0.0
    %401 = vmatmul.mubr.f32.gmra.mrb[0].mxu0 %v312
    %v402 = vpop.f32.mrb[0].mxu0
    %v403 = vadd.f32 %v332, %v402
    %v404 = vpop.f32.mrb[0].mxu0
    %405 = vmatprep.mubr.f32.mxu0 0.0
    %406 = vmatmul.mubr.f32.gmra.mrb[0].mxu0 %v313
    %v407 = vpop.f32.mrb[0].mxu0
    %v408 = vadd.f32 %v333, %v407
    %v409 = vpop.f32.mrb[0].mxu0
    %410 = vmatprep.mubr.f32.mxu0 0.0
    %411 = vmatmul.mubr.f32.gmra.mrb[0].mxu0 %v314
    %v412 = vpop.f32.mrb[0].mxu0
    %v413 = vadd.f32 %v334, %v412
    %v414 = vpop.f32.mrb[0].mxu0
    %415 = vmatprep.mubr.f32.mxu0 0.0
    %416 = vmatmul.mubr.f32.gmra.mrb[0].mxu0 %v315
    %v417 = vpop.f32.mrb[0].mxu0
    %v418 = vadd.f32 %v335, %v417
    %v419 = vpop.f32.mrb[0].mxu0
    %420 = vdwg.mxu0
    %v421 = vmul.f32 %v403, %v403
    %v422 = vmul.f32 %v413, %v413
    %vm423 = vcmask 261120
    %v424 = vsel %vm423, %v421, 0.0
    %425 = vadd.xlane.f32.xlu0 %v424
    %v426 = vpop.xlane.xlu0 %425
    %v427 = vsel %vm423, %v422, 0.0
    %428 = vadd.xlane.f32.xlu0 %v427
    %v429 = vpop.xlane.xlu0 %428
    %v430 = vmax.f32 %v426, 1e-24
    %v431 = vmax.f32 %v429, 1e-24
    %v432 = vrsqrt.pop %v430
    %v433 = vrsqrt.pop %v431
    %v434 = vmul.f32 %v403, %v432
    %v435 = vmul.f32 %v413, %v433
    %v436 = vmul.f32 %v418, 0.98
    %v437 = vsub.f32 %v408, %v436
    %v438 = vadd.f32 %v434, %v435
    %v440 = vsel %vm423, %v437, 0
    %v443 = vsel %vm423, %v434, 0
    %v446 = vsel %vm423, %v408, 0
    %v449 = vsel %vm423, %v438, 0
    %451 = vmatprep.subr.mxu0 0.0
    %452 = vmatpush1.xpose.msra.mxu0 %v449
    %453 = vmatprep.subr.mxu0 0.0
    %454 = vmatpush1.xpose.msra.mxu0 0.0
    %455 = vmatprep.subr.mxu0 0.0
    %456 = vmatpush1.xpose.msra.mxu0 0.0
    %457 = vmatprep.subr.mxu0 0.0
    %458 = vmatpush1.xpose.msra.mxu0 0.0
    %459 = vmatprep.subr.mxu0 0.0
    %460 = vmatpush1.xpose.msra.mxu0 0.0
    %461 = vmatprep.subr.mxu0 0.0
    %462 = vmatpush1.xpose.msra.mxu0 0.0
    %463 = vmatprep.subr.mxu0 0.0
    %464 = vmatpush1.xpose.msra.mxu0 0.0
    %465 = vmatprep.subr.mxu0 0.0
    %466 = vmatpush1.xpose.msra.mxu0 0.0
    %467 = vmatprep.subr.mxu0 0.0
    %468 = vmatpush1.xpose.msra.mxu0 0.0
    %469 = vmatprep.subr.mxu0 0.0
    %470 = vmatpush1.xpose.msra.mxu0 0.0
    %471 = vmatprep.subr.mxu0 0.0
    %472 = vmatpush1.xpose.msra.mxu0 0.0
    %473 = vmatprep.subr.mxu0 0.0
    %474 = vmatpush1.xpose.msra.mxu0 0.0
    %475 = vmatprep.subr.mxu0 0.0
    %476 = vmatpush1.xpose.msra.mxu0 0.0
    %477 = vmatprep.subr.mxu0 0.0
    %478 = vmatpush1.xpose.msra.mxu0 0.0
    %479 = vmatprep.subr.mxu0 0.0
    %480 = vmatpush1.xpose.msra.mxu0 0.0
    %481 = vmatprep.subr.mxu0 0.0
    %482 = vmatpush1.xpose.msra.mxu0 0.0
    %483 = vmatprep.subr.mxu0 0.0
    %484 = vmatpush1.xpose.msra.mxu0 0.0
    %485 = vmatprep.subr.mxu0 0.0
    %486 = vmatpush1.xpose.msra.mxu0 0.0
    %487 = vmatprep.subr.mxu0 0.0
    %488 = vmatpush1.xpose.msra.mxu0 0.0
    %489 = vmatprep.subr.mxu0 0.0
    %490 = vmatpush1.xpose.msra.mxu0 0.0
    %491 = vmatprep.subr.mxu0 0.0
    %492 = vmatpush1.xpose.msra.mxu0 0.0
    %493 = vmatprep.subr.mxu0 0.0
    %494 = vmatpush1.xpose.msra.mxu0 0.0
    %495 = vmatprep.subr.mxu0 0.0
    %496 = vmatpush1.xpose.msra.mxu0 0.0
    %497 = vmatprep.subr.mxu0 0.0
    %498 = vmatpush1.xpose.msra.mxu0 0.0
    %499 = vmatprep.subr.mxu0 0.0
    %500 = vmatpush1.xpose.msra.mxu0 0.0
    %501 = vmatprep.subr.mxu0 0.0
    %502 = vmatpush1.xpose.msra.mxu0 0.0
    %503 = vmatprep.subr.mxu0 0.0
    %504 = vmatpush1.xpose.msra.mxu0 0.0
    %505 = vmatprep.subr.mxu0 0.0
    %506 = vmatpush1.xpose.msra.mxu0 0.0
    %507 = vmatprep.subr.mxu0 0.0
    %508 = vmatpush1.xpose.msra.mxu0 0.0
    %509 = vmatprep.subr.mxu0 0.0
    %510 = vmatpush1.xpose.msra.mxu0 0.0
    %511 = vmatprep.subr.mxu0 0.0
    %512 = vmatpush1.xpose.msra.mxu0 0.0
    %513 = vmatprep.subr.mxu0 0.0
    %514 = vmatpush1.xpose.msra.mxu0 0.0
    %515 = vmatprep.mubr.f32.mxu0 0.0
    %516 = vmatmul.mubr.f32.gmra.mrb[0].mxu0 %v440
    %v517 = vpop.f32.mrb[0].mxu0
    %v518 = vadd.f32 0.0, %v517
    %v519 = vpop.f32.mrb[0].mxu0
    %520 = vmatprep.mubr.f32.mxu0 0.0
    %521 = vmatmul.mubr.f32.gmra.mrb[0].mxu0 %v443
    %v522 = vpop.f32.mrb[0].mxu0
    %v523 = vadd.f32 0.0, %v522
    %v524 = vpop.f32.mrb[0].mxu0
    %525 = vmatprep.mubr.f32.mxu0 0.0
    %526 = vmatmul.mubr.f32.gmra.mrb[0].mxu0 %v446
    %v527 = vpop.f32.mrb[0].mxu0
    %v528 = vadd.f32 0.0, %v527
    %v529 = vpop.f32.mrb[0].mxu0
    %530 = vdwg.mxu0
    %v531 = vld [vmem:[%s4] sm:$0xff]
    %v532 = vld [vmem:[%s4 + $0x8] sm:$0xff]
    %v533 = vld [vmem:[%s4 + $0x10] sm:$0xff]
    %v534 = vld [vmem:[%s4 + $0x18] sm:$0xff]
    %v535 = vld [vmem:[%s4 + $0x20] sm:$0xff]
    %v536 = vld [vmem:[%s4 + $0x28] sm:$0xff]
    %v537 = vmul.f32 %v518, %v518
    %v538 = vmul.f32 %v523, %v523
    %v539 = vmul.f32 %v528, %v528
    %v540 = vmul.f32 %v537, %v531
    %v541 = vmul.f32 %v538, %v532
    %v542 = vmul.f32 %v539, %v533
    %v543 = vmul.f32 %v518, %v534
    %v544 = vmul.f32 %v523, %v535
    %v545 = vmul.f32 %v528, %v536
    %v546 = vadd.f32 %v540, %v543
    %v547 = vadd.f32 %v541, %v544
    %v548 = vadd.f32 %v542, %v545
    %vm549 = vcmask 64512
    %v550 = vsel %vm549, %v546, 0.0
    %v551 = vsel %vm549, %v547, 0.0
    %v552 = vadd.f32 %v550, %v551
    %v553 = vsel %vm549, %v548, 0.0
    %v554 = vadd.f32 %v552, %v553
    %555 = vadd.xlane.f32.xlu0 %v554
    %v556 = vpop.xlane.xlu0 %555
    %v557 = vrot.slane %v556, 4
    %v558 = vadd.f32 %v556, %v557
    %v559 = vrot.slane %v558, 2
    %v560 = vadd.f32 %v558, %v559
    %v561 = vrot.slane %v560, 1
    %v562 = vadd.f32 %v560, %v561
    %s563 = vtos %v562
    %s564 = scalar_lea.smem [#allocation2], 0
    %565 = sst [smem:[%s564]] %s563
    // Predicated region
    $region22: #{svdsr_forward.1} parent=1 // pred_check
      _
    $region23: #{svdsr_forward.1} parent=1 // pred_check_branch
      %567 = sbr.rel (0) target = $region25
    $region24: #{svdsr_forward.1} parent=1 // pred_region
      %s569 = ssub.s32 16, 16
      %570 = vsyncadd [#allocation3], %s569
      %573 = dma.smem_to_hbm [#allocation2], 16, %s5, [#allocation3]
    $region25: #{svdsr_forward.1} parent=1 // pred_fallthru
      _
    // Predicated region
    $region26: #{svdsr_forward.1} parent=1 // pred_check
      _
    $region27: #{svdsr_forward.1} parent=1 // pred_check_branch
      %575 = sbr.rel (0) target = $region29
    $region28: #{svdsr_forward.1} parent=1 // pred_region
      %576 = dma.done [#allocation3], 16
    $region29: #{svdsr_forward.1} parent=1 // pred_fallthru
      _
    %577 = sfence
    %578 = vsyncpa [#allocation3], 1

</llo_original>
